<compile_context>
chip_gen: v5e
topology: v5e:2x2
jax: 0.10.0
libtpu: 0.0.40
codegen_flags: <defaults>
</compile_context>

<pallas_src>
import jax
import jax.numpy as jnp
from jax.experimental import pallas as pl
from jax.experimental.pallas import tpu as pltpu


def _round_up(v: int, m: int) -> int:
    return ((v + m - 1) // m) * m


def _cdiv(a: int, b: int) -> int:
    return (a + b - 1) // b


def basic_block_kernel(x_ref, w1_ref, b1_ref, w2_ref, b2_ref, o_ref):
    """One (TM, Dk) row tile of: out = relu(relu(x@W1 + b1)@W2 + b2 + x).

    MXU operands use the weights' dtype (bf16 or f32); accumulation, bias
    adds, the residual add and both ReLUs stay in f32 (v5e has no bf16 VPU).
    """
    cd = w1_ref.dtype
    xv = x_ref[...]                          # load the tile once
    x_f32 = xv.astype(jnp.float32)           # residual path
    h = jnp.dot(xv.astype(cd), w1_ref[...],
                preferred_element_type=jnp.float32) + b1_ref[...]
    h = jnp.maximum(h, 0.0)
    y = jnp.dot(h.astype(cd), w2_ref[...],
                preferred_element_type=jnp.float32) + b2_ref[...]
    y = jnp.maximum(y + x_f32, 0.0)
    o_ref[...] = y.astype(o_ref.dtype)


def basic_block(x, w1, b1, w2, b2, *, compute_dtype=jnp.bfloat16, tm_cap=512,
                target_grid_steps=4):
    """BasicBlock forward.

    x      : [..., planes] (any float dtype; HBM traffic stays in this dtype)
    w1, w2 : torch-layout weights, shape (planes, planes) = (out, in)
    b1, b2 : (planes,)
    """
    orig_shape = x.shape
    D = orig_shape[-1]
    out_dtype = x.dtype
    x2 = x.reshape(-1, D)
    M = x2.shape[0]

    # Weight prep is tiny (Dk^2) and in a real model would be done once.
    w1t = jnp.asarray(w1, jnp.float32).T      # torch (out, in) -> (in, out)
    w2t = jnp.asarray(w2, jnp.float32).T
    b1f = jnp.asarray(b1, jnp.float32)
    b2f = jnp.asarray(b2, jnp.float32)

    if D % 128 == 0:
        # Already lane-dense: no activation copy at all.
        g, Dk = 1, D
        xk = x2
        w1p, w2p = w1t.astype(compute_dtype), w2t.astype(compute_dtype)
        b1p, b2p = b1f.reshape(1, D), b2f.reshape(1, D)
    elif D <= 64 and 128 % D == 0:
        # Lane-pack: g rows per 128-lane row, block-diagonal weights, tiled bias.
        g = 128 // D
        Dk = g * D
        Mg = _round_up(M, g)                  # at most g-1 extra rows
        xg = x2 if Mg == M else jnp.zeros((Mg, D), x2.dtype).at[:M].set(x2)
        xk = xg.reshape(Mg // g, Dk)
        eye_g = jnp.eye(g, dtype=jnp.float32)

        def block_diag(wt):
            return (jnp.einsum("ab,ij->aibj", eye_g, wt)
                    .reshape(Dk, Dk).astype(compute_dtype))

        w1p, w2p = block_diag(w1t), block_diag(w2t)
        b1p = jnp.tile(b1f, g).reshape(1, Dk)
        b2p = jnp.tile(b2f, g).reshape(1, Dk)
    else:
        # General case: zero-pad the lane dim to a multiple of 128.  Padded
        # columns stay exactly zero through both linears, the residual and the
        # ReLUs, so the result is exact; they are sliced off afterwards.
        g = 1
        Dk = _round_up(D, 128)
        xk = jnp.zeros((M, Dk), x2.dtype).at[:, :D].set(x2)

        def pad_w(wt):
            return (jnp.zeros((Dk, Dk), jnp.float32).at[:D, :D].set(wt)
                    .astype(compute_dtype))

        def pad_b(bf):
            return jnp.zeros((1, Dk), jnp.float32).at[0, :D].set(bf)

        w1p, w2p = pad_w(w1t), pad_w(w2t)
        b1p, b2p = pad_b(b1f), pad_b(b2f)

    Mk = xk.shape[0]

    # Row-tile size: aim for >= target_grid_steps grid steps so x/out DMA
    # pipelines behind the MXU work and the grid shards across both TCs (v7x).
    if Mk <= 8:
        TM = Mk                                # full second-minor dim is allowed
    else:
        TM = _round_up(_cdiv(Mk, target_grid_steps), 8)
        TM = max(8, min(TM, _round_up(tm_cap, 8)))

    # Keep the per-step VMEM plan under budget (v7x physical VMEM is 64 MiB).
    x_isz = jnp.dtype(xk.dtype).itemsize
    o_isz = jnp.dtype(out_dtype).itemsize
    w_isz = jnp.dtype(compute_dtype).itemsize

    def plan_bytes(tm_):
        act = 2 * tm_ * Dk * (x_isz + o_isz)             # double-buffered x/out tiles
        wts = 2 * (2 * Dk * Dk * w_isz + 2 * Dk * 4)     # W1,W2,b1,b2 (worst case 2 bufs)
        scratch = 4 * tm_ * Dk * 4                       # f32 intermediates
        return act + wts + scratch

    VMEM_BUDGET = 48 * 1024 * 1024
    while TM > 8 and plan_bytes(TM) > VMEM_BUDGET:
        TM = max(8, _round_up(TM // 2, 8))
    # TODO(synk): if the weights alone exceed VMEM (Dk >~ 2500 bf16 on v7x),
    # switch to a K-tiled inner pipeline (pltpu.emit_pipeline with W1/W2 kept
    # in HBM via memory_space=pl.ANY) instead of fully-resident weights.
    vmem_limit = int(min(64 * 1024 * 1024,
                         max(32 * 1024 * 1024, plan_bytes(TM) * 1.3)))

    grid_m = _cdiv(Mk, TM)
    cost = pl.CostEstimate(
        flops=4 * Mk * Dk * Dk,                          # two (Mk,Dk)x(Dk,Dk) GEMMs
        transcendentals=0,
        bytes_accessed=Mk * Dk * (x_isz + o_isz) + 2 * Dk * Dk * w_isz + 2 * Dk * 4,
    )

    def call(single_buffer_weights):
        const_kw = dict(pipeline_mode=pl.Buffered(1)) if single_buffer_weights else {}
        return pl.pallas_call(
            basic_block_kernel,
            out_shape=jax.ShapeDtypeStruct((Mk, Dk), out_dtype),
            grid=(grid_m,),
            in_specs=[
                pl.BlockSpec((TM, Dk), lambda i: (i, 0)),              # x rows (pipelined)
                pl.BlockSpec((Dk, Dk), lambda i: (0, 0), **const_kw),  # W1 (VMEM resident)
                pl.BlockSpec((1, Dk), lambda i: (0, 0), **const_kw),   # b1
                pl.BlockSpec((Dk, Dk), lambda i: (0, 0), **const_kw),  # W2
                pl.BlockSpec((1, Dk), lambda i: (0, 0), **const_kw),   # b2
            ],
            out_specs=pl.BlockSpec((TM, Dk), lambda i: (i, 0)),
            compiler_params=pltpu.CompilerParams(
                dimension_semantics=("parallel",),       # shard row tiles across TCs (v7x)
                vmem_limit_bytes=vmem_limit,
            ),
            cost_estimate=cost,
        )(xk, w1p, b1p, w2p, b2p)

    try:
        out = call(single_buffer_weights=True)
    except Exception:
        # pipeline_mode=pl.Buffered(1) is an optional VMEM optimization on the
        # constant-index weight operands; fall back to default double
        # buffering if this JAX/Mosaic build rejects it.  Any other bug would
        # re-raise from the fallback path as well.
        out = call(single_buffer_weights=False)

    # Undo pack / pad (free reshapes; slices only when actually needed).
    if g > 1:
        out = out.reshape(Mk * g, D)
        if Mk * g != M:
            out = out[:M]
    elif Dk != D:
        out = out[:, :D]
    return out.reshape(orig_shape)


def _torch_like_linear_init(key, fan_in, fan_out):
    """nn.Linear default init: U(-1/sqrt(fan_in), 1/sqrt(fan_in)); weight is (out, in)."""
    kw, kb = jax.random.split(key)
    bound = 1.0 / jnp.sqrt(jnp.float32(fan_in))
    w = jax.random.uniform(kw, (fan_out, fan_in), jnp.float32, -bound, bound)
    b = jax.random.uniform(kb, (fan_out,), jnp.float32, -bound, bound)
    return w, b


def _reference(x, w1, b1, w2, b2):
    h = jnp.maximum(x @ w1.T + b1, 0.0)
    y = h @ w2.T + b2
    return jnp.maximum(y + x, 0.0)


if __name__ == "__main__":
    root = jax.random.PRNGKey(0)

    # (batch, planes):
    #   (8, 32)   -> lane-packed path (g=4), single-step grid
    #   (50, 128) -> lane-dense direct path, multi-step grid with a ragged last tile
    #   (24, 96)  -> lane zero-pad path
    configs = [(8, 32), (50, 128), (24, 96)]
    saved = None
    for idx, (batch, planes) in enumerate(configs):
        key = jax.random.fold_in(root, idx)
        kx, k1, k2 = jax.random.split(key, 3)
        x = jax.random.normal(kx, (batch, planes), jnp.float32)
        w1, b1 = _torch_like_linear_init(k1, planes, planes)   # Linear1
        w2, b2 = _torch_like_linear_init(k2, planes, planes)   # Linear2
        ref = _reference(x, w1, b1, w2, b2)

        out = jax.block_until_ready(
            basic_block(x, w1, b1, w2, b2, compute_dtype=jnp.float32))
        assert out.shape == x.shape
        assert jnp.allclose(out, ref, atol=1e-4, rtol=1e-5), \
            f"f32 mismatch vs reference (planes={planes}, batch={batch})"
        if idx == 0:
            saved = (x, w1, b1, w2, b2, ref)

    # bf16-MXU / f32-accumulate path (the fast path on v6e/v7x) on config 0.
    x, w1, b1, w2, b2, ref = saved
    out_bf16 = jax.block_until_ready(
        basic_block(x, w1, b1, w2, b2, compute_dtype=jnp.bfloat16))
    assert jnp.allclose(out_bf16, ref, atol=1e-1, rtol=5e-2), "bf16 path drifted too far"

    print("KERNEL_OK")
</pallas_src>

<mosaic_0001>
module attributes {stable_mosaic.version = 11 : i64} {
  func.func @basic_block_kernel(%arg0: i32, %arg1: memref<2x128xf32, #tpu.memory_space<vmem>>, %arg2: memref<128x128xf32, #tpu.memory_space<vmem>>, %arg3: memref<1x128xf32, #tpu.memory_space<vmem>>, %arg4: memref<128x128xf32, #tpu.memory_space<vmem>>, %arg5: memref<1x128xf32, #tpu.memory_space<vmem>>, %arg6: memref<2x128xf32, #tpu.memory_space<vmem>>) attributes {dimension_semantics = [#tpu.dimension_semantics<parallel>], iteration_bounds = array<i64: 1>, scalar_prefetch = 0 : i64, scratch_operands = 0 : i64, tpu.core_type = #tpu.core_type<tc>, window_params = [{transform_indices = @transform_0, window_bounds = array<i64: 2, 128>}, {pipeline_mode = #tpu.pipeline_mode<synchronous>, transform_indices = @transform_1, window_bounds = array<i64: 128, 128>}, {pipeline_mode = #tpu.pipeline_mode<synchronous>, transform_indices = @transform_2, window_bounds = array<i64: 1, 128>}, {pipeline_mode = #tpu.pipeline_mode<synchronous>, transform_indices = @transform_3, window_bounds = array<i64: 128, 128>}, {pipeline_mode = #tpu.pipeline_mode<synchronous>, transform_indices = @transform_4, window_bounds = array<i64: 1, 128>}, {transform_indices = @transform_5, window_bounds = array<i64: 2, 128>}]} {
    %c0 = arith.constant 0 : index
    %c0_0 = arith.constant 0 : index
    %0 = vector.load %arg1[%c0, %c0_0] : memref<2x128xf32, #tpu.memory_space<vmem>>, vector<2x128xf32>
    %c0_1 = arith.constant 0 : index
    %c0_2 = arith.constant 0 : index
    %1 = vector.load %arg2[%c0_1, %c0_2] : memref<128x128xf32, #tpu.memory_space<vmem>>, vector<128x128xf32>
    %cst = arith.constant dense<0.000000e+00> : vector<2x128xf32>
    %2 = tpu.matmul %0, %1, %cst {dimension_numbers = #tpu.dot_dimension_numbers<[1], [0], [0], [1], [0, 0, 1, 1], [], []>} : vector<2x128xf32>, vector<128x128xf32>, vector<2x128xf32> -> vector<2x128xf32>
    %c0_3 = arith.constant 0 : index
    %c0_4 = arith.constant 0 : index
    %3 = vector.load %arg3[%c0_3, %c0_4] : memref<1x128xf32, #tpu.memory_space<vmem>>, vector<1x128xf32>
    %4 = vector.broadcast %3 : vector<1x128xf32> to vector<2x128xf32>
    %5 = arith.addf %2, %4 : vector<2x128xf32>
    %cst_5 = arith.constant 0.000000e+00 : f32
    %6 = vector.broadcast %cst_5 : f32 to vector<2x128xf32>
    %7 = arith.maximumf %5, %6 : vector<2x128xf32>
    %c0_6 = arith.constant 0 : index
    %c0_7 = arith.constant 0 : index
    %8 = vector.load %arg4[%c0_6, %c0_7] : memref<128x128xf32, #tpu.memory_space<vmem>>, vector<128x128xf32>
    %cst_8 = arith.constant dense<0.000000e+00> : vector<2x128xf32>
    %9 = tpu.matmul %7, %8, %cst_8 {dimension_numbers = #tpu.dot_dimension_numbers<[1], [0], [0], [1], [0, 0, 1, 1], [], []>} : vector<2x128xf32>, vector<128x128xf32>, vector<2x128xf32> -> vector<2x128xf32>
    %c0_9 = arith.constant 0 : index
    %c0_10 = arith.constant 0 : index
    %10 = vector.load %arg5[%c0_9, %c0_10] : memref<1x128xf32, #tpu.memory_space<vmem>>, vector<1x128xf32>
    %11 = vector.broadcast %10 : vector<1x128xf32> to vector<2x128xf32>
    %12 = arith.addf %9, %11 : vector<2x128xf32>
    %13 = arith.addf %12, %0 : vector<2x128xf32>
    %cst_11 = arith.constant 0.000000e+00 : f32
    %14 = vector.broadcast %cst_11 : f32 to vector<2x128xf32>
    %15 = arith.maximumf %13, %14 : vector<2x128xf32>
    %c0_12 = arith.constant 0 : index
    %c0_13 = arith.constant 0 : index
    %16 = vector.load %arg6[%c0_12, %c0_13] : memref<2x128xf32, #tpu.memory_space<vmem>>, vector<2x128xf32>
    tpu.vector_store %arg6[%c0_12, %c0_13], %15 {strides = array<i32>} : memref<2x128xf32, #tpu.memory_space<vmem>>, vector<2x128xf32>,
    return
  }
  func.func @transform_0(%arg0: i32) -> (i32, i32) {
    %c0_i32 = arith.constant 0 : i32
    %c0_i32_0 = arith.constant 0 : i32
    return %arg0, %c0_i32 : i32, i32
  }
  func.func @transform_1(%arg0: i32) -> (i32, i32) {
    %c0_i32 = arith.constant 0 : i32
    %c0_i32_0 = arith.constant 0 : i32
    %c0_i32_1 = arith.constant 0 : i32
    return %c0_i32, %c0_i32_0 : i32, i32
  }
  func.func @transform_2(%arg0: i32) -> (i32, i32) {
    %c0_i32 = arith.constant 0 : i32
    %c0_i32_0 = arith.constant 0 : i32
    %c0_i32_1 = arith.constant 0 : i32
    return %c0_i32, %c0_i32_0 : i32, i32
  }
  func.func @transform_3(%arg0: i32) -> (i32, i32) {
    %c0_i32 = arith.constant 0 : i32
    %c0_i32_0 = arith.constant 0 : i32
    %c0_i32_1 = arith.constant 0 : i32
    return %c0_i32, %c0_i32_0 : i32, i32
  }
  func.func @transform_4(%arg0: i32) -> (i32, i32) {
    %c0_i32 = arith.constant 0 : i32
    %c0_i32_0 = arith.constant 0 : i32
    %c0_i32_1 = arith.constant 0 : i32
    return %c0_i32, %c0_i32_0 : i32, i32
  }
  func.func @transform_5(%arg0: i32) -> (i32, i32) {
    %c0_i32 = arith.constant 0 : i32
    %c0_i32_0 = arith.constant 0 : i32
    return %arg0, %c0_i32 : i32, i32
  }
}

module attributes {stable_mosaic.version = 11 : i64} {
  func.func @basic_block_kernel(%arg0: i32, %arg1: memref<2x128xf32, #tpu.memory_space<vmem>>, %arg2: memref<128x128xf32, #tpu.memory_space<vmem>>, %arg3: memref<1x128xf32, #tpu.memory_space<vmem>>, %arg4: memref<128x128xf32, #tpu.memory_space<vmem>>, %arg5: memref<1x128xf32, #tpu.memory_space<vmem>>, %arg6: memref<2x128xf32, #tpu.memory_space<vmem>>) attributes {dimension_semantics = [#tpu.dimension_semantics<parallel>], iteration_bounds = array<i64: 1>, scalar_prefetch = 0 : i64, scratch_operands = 0 : i64, tpu.core_type = #tpu.core_type<tc>, window_params = [{transform_indices = @transform_0, window_bounds = array<i64: 2, 128>}, {pipeline_mode = #tpu.pipeline_mode<synchronous>, transform_indices = @transform_1, window_bounds = array<i64: 128, 128>}, {pipeline_mode = #tpu.pipeline_mode<synchronous>, transform_indices = @transform_2, window_bounds = array<i64: 1, 128>}, {pipeline_mode = #tpu.pipeline_mode<synchronous>, transform_indices = @transform_3, window_bounds = array<i64: 128, 128>}, {pipeline_mode = #tpu.pipeline_mode<synchronous>, transform_indices = @transform_4, window_bounds = array<i64: 1, 128>}, {transform_indices = @transform_5, window_bounds = array<i64: 2, 128>}]} {
    %c0 = arith.constant 0 : index
    %c0_0 = arith.constant 0 : index
    %0 = vector.load %arg1[%c0, %c0_0] : memref<2x128xf32, #tpu.memory_space<vmem>>, vector<2x128xf32>
    %c0_1 = arith.constant 0 : index
    %c0_2 = arith.constant 0 : index
    %1 = vector.load %arg2[%c0_1, %c0_2] : memref<128x128xf32, #tpu.memory_space<vmem>>, vector<128x128xf32>
    %cst = arith.constant dense<0.000000e+00> : vector<2x128xf32>
    %2 = tpu.matmul %0, %1, %cst {dimension_numbers = #tpu.dot_dimension_numbers<[1], [0], [0], [1], [0, 0, 1, 1], [], []>} : vector<2x128xf32>, vector<128x128xf32>, vector<2x128xf32> -> vector<2x128xf32>
    %c0_3 = arith.constant 0 : index
    %c0_4 = arith.constant 0 : index
    %3 = vector.load %arg3[%c0_3, %c0_4] : memref<1x128xf32, #tpu.memory_space<vmem>>, vector<1x128xf32>
    %4 = vector.broadcast %3 : vector<1x128xf32> to vector<2x128xf32>
    %5 = arith.addf %2, %4 : vector<2x128xf32>
    %cst_5 = arith.constant 0.000000e+00 : f32
    %6 = vector.broadcast %cst_5 : f32 to vector<2x128xf32>
    %7 = arith.maximumf %5, %6 : vector<2x128xf32>
    %c0_6 = arith.constant 0 : index
    %c0_7 = arith.constant 0 : index
    %8 = vector.load %arg4[%c0_6, %c0_7] : memref<128x128xf32, #tpu.memory_space<vmem>>, vector<128x128xf32>
    %cst_8 = arith.constant dense<0.000000e+00> : vector<2x128xf32>
    %9 = tpu.matmul %7, %8, %cst_8 {dimension_numbers = #tpu.dot_dimension_numbers<[1], [0], [0], [1], [0, 0, 1, 1], [], []>} : vector<2x128xf32>, vector<128x128xf32>, vector<2x128xf32> -> vector<2x128xf32>
    %c0_9 = arith.constant 0 : index
    %c0_10 = arith.constant 0 : index
    %10 = vector.load %arg5[%c0_9, %c0_10] : memref<1x128xf32, #tpu.memory_space<vmem>>, vector<1x128xf32>
    %11 = vector.broadcast %10 : vector<1x128xf32> to vector<2x128xf32>
    %12 = arith.addf %9, %11 : vector<2x128xf32>
    %13 = arith.addf %12, %0 : vector<2x128xf32>
    %cst_11 = arith.constant 0.000000e+00 : f32
    %14 = vector.broadcast %cst_11 : f32 to vector<2x128xf32>
    %15 = arith.maximumf %13, %14 : vector<2x128xf32>
    %c0_12 = arith.constant 0 : index
    %c0_13 = arith.constant 0 : index
    %16 = vector.load %arg6[%c0_12, %c0_13] : memref<2x128xf32, #tpu.memory_space<vmem>>, vector<2x128xf32>
    tpu.vector_store %arg6[%c0_12, %c0_13], %15 {strides = array<i32>} : memref<2x128xf32, #tpu.memory_space<vmem>>, vector<2x128xf32>,
    return
  }
  func.func @transform_0(%arg0: i32) -> (i32, i32) {
    %c0_i32 = arith.constant 0 : i32
    %c0_i32_0 = arith.constant 0 : i32
    return %arg0, %c0_i32 : i32, i32
  }
  func.func @transform_1(%arg0: i32) -> (i32, i32) {
    %c0_i32 = arith.constant 0 : i32
    %c0_i32_0 = arith.constant 0 : i32
    %c0_i32_1 = arith.constant 0 : i32
    return %c0_i32, %c0_i32_0 : i32, i32
  }
  func.func @transform_2(%arg0: i32) -> (i32, i32) {
    %c0_i32 = arith.constant 0 : i32
    %c0_i32_0 = arith.constant 0 : i32
    %c0_i32_1 = arith.constant 0 : i32
    return %c0_i32, %c0_i32_0 : i32, i32
  }
  func.func @transform_3(%arg0: i32) -> (i32, i32) {
    %c0_i32 = arith.constant 0 : i32
    %c0_i32_0 = arith.constant 0 : i32
    %c0_i32_1 = arith.constant 0 : i32
    return %c0_i32, %c0_i32_0 : i32, i32
  }
  func.func @transform_4(%arg0: i32) -> (i32, i32) {
    %c0_i32 = arith.constant 0 : i32
    %c0_i32_0 = arith.constant 0 : i32
    %c0_i32_1 = arith.constant 0 : i32
    return %c0_i32, %c0_i32_0 : i32, i32
  }
  func.func @transform_5(%arg0: i32) -> (i32, i32) {
    %c0_i32 = arith.constant 0 : i32
    %c0_i32_0 = arith.constant 0 : i32
    return %arg0, %c0_i32 : i32, i32
  }
}

</mosaic_0001>

<llo_original>
// kernel: tpu_custom_call.1
$region0: #{tpu_custom_call.1}
  #allocation0 [shape = 'u32[]', space=smem, size = 0x4, offset = 0x4, fixed_abs, tag = 'smem constant byte address 0x4 - core index']
  #allocation1 [shape = 'u32[72,128]{1,0:T(1,128)}', space=vmem, size = 0x9000, scoped, tag = 'internal scratch']
  %s0 = inlined_call_operand.hbm [shape: f32[2,128], index: 0, kind: input, shape index: {}]
  %s1 = inlined_call_operand.hbm [shape: f32[128,128], index: 1, kind: input, shape index: {}]
  %s2 = inlined_call_operand.vmem [shape: f32[1,128], index: 2, kind: input, shape index: {}]
  %s3 = inlined_call_operand.hbm [shape: f32[128,128], index: 3, kind: input, shape index: {}]
  %s4 = inlined_call_operand.vmem [shape: f32[1,128], index: 4, kind: input, shape index: {}]
  %s5 = inlined_call_operand.hbm [shape: f32[2,128], index: 5, kind: output, shape index: {}]
  %s6 = sld [smem:[#allocation0]]
  $region42: #{tpu_custom_call.1} parent=0
    _
  %s8 = ssub.s32 1, %s6
  %s9 = scalar_select 0, %s8, %s6
  $region1: #{tpu_custom_call.1} parent=0
    #allocation2 [shape = 'u8[1024]{0}', space=vmem, size = 0x400, scoped, tag = 'input window, operand 0, single buffered']
    #allocation3 [shape = 's32[1]{0}', space=sflag, size = 0x4, scoped, tag = 'scoped memory for tpu_custom_call.1']
    #allocation4 [shape = 's32[1]{0}', space=sflag, size = 0x4, scoped, tag = 'scoped memory for tpu_custom_call.1']
    #allocation5 [shape = 'u8[65536]{0}', space=vmem, size = 0x10000, scoped, tag = 'input window, operand 1, single buffered']
    #allocation6 [shape = 's32[1]{0}', space=sflag, size = 0x4, scoped, tag = 'scoped memory for tpu_custom_call.1']
    #allocation7 [shape = 'u8[65536]{0}', space=vmem, size = 0x10000, scoped, tag = 'input window, operand 3, single buffered']
    #allocation8 [shape = 'u8[1024]{0}', space=vmem, size = 0x400, scoped, tag = 'output window, operand 0, single buffered']
    %10 = vsyncpa [#allocation3], 0
    %11 = vsyncpa [#allocation6], 0
    %12 = vsyncpa [#allocation4], 0
    // Predicated region
    $region2: #{tpu_custom_call.1} parent=1 // pred_check
      _
    $region3: #{tpu_custom_call.1} parent=1 // pred_check_branch
      %14 = sbr.rel (0) target = $region5
    $region4: #{tpu_custom_call.1} parent=1 // pred_region
      %16 = vsyncadd [#allocation3], 0
      %s18 = sshll.u32 %s0, 4
      %s19 = int_to_ptr.hbm [resolvable:$true] %s18
      %s20 = sshll.u32 [#allocation2], 4
      %s21 = int_to_ptr.vmem [resolvable:$true] %s20
      %23 = dma.hbm_to_vmem [thread:$0]  %s19, 32, %s21, [#allocation3]
    $region5: #{tpu_custom_call.1} parent=1 // pred_fallthru
      _
    // Predicated region
    $region6: #{tpu_custom_call.1} parent=1 // pred_check
      _
    $region7: #{tpu_custom_call.1} parent=1 // pred_check_branch
      %25 = sbr.rel (0) target = $region9
    $region8: #{tpu_custom_call.1} parent=1 // pred_region
      %27 = vsyncadd [#allocation6], 0
      %s28 = sshll.u32 %s1, 4
      %s29 = int_to_ptr.hbm [resolvable:$true] %s28
      %s30 = sshll.u32 [#allocation5], 4
      %s31 = int_to_ptr.vmem [resolvable:$true] %s30
      %36 = dma.hbm_to_vmem [thread:$0]  %s29, 2048, %s31, [#allocation6], 128, 128, 8
    $region9: #{tpu_custom_call.1} parent=1 // pred_fallthru
      _
    // Predicated region
    $region10: #{tpu_custom_call.1} parent=1 // pred_check
      _
    $region11: #{tpu_custom_call.1} parent=1 // pred_check_branch
      %38 = sbr.rel (0) target = $region13
    $region12: #{tpu_custom_call.1} parent=1 // pred_region
      _
    $region13: #{tpu_custom_call.1} parent=1 // pred_fallthru
      _
    // Predicated region
    $region14: #{tpu_custom_call.1} parent=1 // pred_check
      _
    $region15: #{tpu_custom_call.1} parent=1 // pred_check_branch
      %40 = sbr.rel (0) target = $region17
    $region16: #{tpu_custom_call.1} parent=1 // pred_region
      %42 = vsyncadd [#allocation6], 0
      %s43 = sshll.u32 %s3, 4
      %s44 = int_to_ptr.hbm [resolvable:$true] %s43
      %s45 = sshll.u32 [#allocation7], 4
      %s46 = int_to_ptr.vmem [resolvable:$true] %s45
      %51 = dma.hbm_to_vmem [thread:$0]  %s44, 2048, %s46, [#allocation6], 128, 128, 8
    $region17: #{tpu_custom_call.1} parent=1 // pred_fallthru
      _
    // Predicated region
    $region18: #{tpu_custom_call.1} parent=1 // pred_check
      _
    $region19: #{tpu_custom_call.1} parent=1 // pred_check_branch
      %53 = sbr.rel (0) target = $region21
    $region20: #{tpu_custom_call.1} parent=1 // pred_region
      _
    $region21: #{tpu_custom_call.1} parent=1 // pred_fallthru
      _
    // Predicated region
    $region22: #{tpu_custom_call.1} parent=1 // pred_check
      _
    $region23: #{tpu_custom_call.1} parent=1 // pred_check_branch
      %55 = sbr.rel (0) target = $region25
    $region24: #{tpu_custom_call.1} parent=1 // pred_region
      %57 = dma.done [#allocation3], 32
    $region25: #{tpu_custom_call.1} parent=1 // pred_fallthru
      _
    // Predicated region
    $region26: #{tpu_custom_call.1} parent=1 // pred_check
      _
    $region27: #{tpu_custom_call.1} parent=1 // pred_check_branch
      %59 = sbr.rel (0) target = $region29
    $region28: #{tpu_custom_call.1} parent=1 // pred_region
      %61 = dma.done [#allocation6], 2048
    $region29: #{tpu_custom_call.1} parent=1 // pred_fallthru
      _
    // Predicated region
    $region30: #{tpu_custom_call.1} parent=1 // pred_check
      _
    $region31: #{tpu_custom_call.1} parent=1 // pred_check_branch
      %63 = sbr.rel (0) target = $region33
    $region32: #{tpu_custom_call.1} parent=1 // pred_region
      %65 = dma.done [#allocation6], 2048
    $region33: #{tpu_custom_call.1} parent=1 // pred_fallthru
      _
    %v66 = vld [vmem:[#allocation2] sm:$0x3]
    %v67 = vld [vmem:[#allocation5] sm:$0xff]
    %v68 = vld [vmem:[#allocation5 + $0x8] sm:$0xff]
    %v69 = vld [vmem:[#allocation5 + $0x10] sm:$0xff]
    %v70 = vld [vmem:[#allocation5 + $0x18] sm:$0xff]
    %v71 = vld [vmem:[#allocation5 + $0x20] sm:$0xff]
    %v72 = vld [vmem:[#allocation5 + $0x28] sm:$0xff]
    %v73 = vld [vmem:[#allocation5 + $0x30] sm:$0xff]
    %v74 = vld [vmem:[#allocation5 + $0x38] sm:$0xff]
    %v75 = vld [vmem:[#allocation5 + $0x40] sm:$0xff]
    %v76 = vld [vmem:[#allocation5 + $0x48] sm:$0xff]
    %v77 = vld [vmem:[#allocation5 + $0x50] sm:$0xff]
    %v78 = vld [vmem:[#allocation5 + $0x58] sm:$0xff]
    %v79 = vld [vmem:[#allocation5 + $0x60] sm:$0xff]
    %v80 = vld [vmem:[#allocation5 + $0x68] sm:$0xff]
    %v81 = vld [vmem:[#allocation5 + $0x70] sm:$0xff]
    %v82 = vld [vmem:[#allocation5 + $0x78] sm:$0xff]
    %v83 = vld [vmem:[%s2] sm:$0x1]
    %v85 = vperm.slane %v83, 0
    %87 = vmatpush.msra.mxu0 %v82
    %88 = vmatpush.msra.mxu0 %v81
    %89 = vmatpush.msra.mxu0 %v80
    %90 = vmatpush.msra.mxu0 %v79
    %91 = vmatpush.msra.mxu0 %v78
    %92 = vmatpush.msra.mxu0 %v77
    %93 = vmatpush.msra.mxu0 %v76
    %94 = vmatpush.msra.mxu0 %v75
    %95 = vmatpush.msra.mxu0 %v74
    %96 = vmatpush.msra.mxu0 %v73
    %97 = vmatpush.msra.mxu0 %v72
    %98 = vmatpush.msra.mxu0 %v71
    %99 = vmatpush.msra.mxu0 %v70
    %100 = vmatpush.msra.mxu0 %v69
    %101 = vmatpush.msra.mxu0 %v68
    %102 = vmatpush.msra.mxu0 %v67
    %103 = vmatmul.f32.gmra.mxu0 %v66
    %v104 = vpop.f32.mrf.mxu0
    %v105 = vadd.f32 %v85, %v104
    %106 = vdwg.mxu0
    %v107 = vmax.f32 %v105, 0.0
    %v108 = vld [vmem:[#allocation7] sm:$0xff]
    %v109 = vld [vmem:[#allocation7 + $0x8] sm:$0xff]
    %v110 = vld [vmem:[#allocation7 + $0x10] sm:$0xff]
    %v111 = vld [vmem:[#allocation7 + $0x18] sm:$0xff]
    %v112 = vld [vmem:[#allocation7 + $0x20] sm:$0xff]
    %v113 = vld [vmem:[#allocation7 + $0x28] sm:$0xff]
    %v114 = vld [vmem:[#allocation7 + $0x30] sm:$0xff]
    %v115 = vld [vmem:[#allocation7 + $0x38] sm:$0xff]
    %v116 = vld [vmem:[#allocation7 + $0x40] sm:$0xff]
    %v117 = vld [vmem:[#allocation7 + $0x48] sm:$0xff]
    %v118 = vld [vmem:[#allocation7 + $0x50] sm:$0xff]
    %v119 = vld [vmem:[#allocation7 + $0x58] sm:$0xff]
    %v120 = vld [vmem:[#allocation7 + $0x60] sm:$0xff]
    %v121 = vld [vmem:[#allocation7 + $0x68] sm:$0xff]
    %v122 = vld [vmem:[#allocation7 + $0x70] sm:$0xff]
    %v123 = vld [vmem:[#allocation7 + $0x78] sm:$0xff]
    %v124 = vld [vmem:[%s4] sm:$0x1]
    %v126 = vperm.slane %v124, 0
    %128 = vmatpush.msra.mxu0 %v123
    %129 = vmatpush.msra.mxu0 %v122
    %130 = vmatpush.msra.mxu0 %v121
    %131 = vmatpush.msra.mxu0 %v120
    %132 = vmatpush.msra.mxu0 %v119
    %133 = vmatpush.msra.mxu0 %v118
    %134 = vmatpush.msra.mxu0 %v117
    %135 = vmatpush.msra.mxu0 %v116
    %136 = vmatpush.msra.mxu0 %v115
    %137 = vmatpush.msra.mxu0 %v114
    %138 = vmatpush.msra.mxu0 %v113
    %139 = vmatpush.msra.mxu0 %v112
    %140 = vmatpush.msra.mxu0 %v111
    %141 = vmatpush.msra.mxu0 %v110
    %142 = vmatpush.msra.mxu0 %v109
    %143 = vmatpush.msra.mxu0 %v108
    %144 = vmatmul.f32.gmra.mxu0 %v107
    %v145 = vpop.f32.mrf.mxu0
    %v146 = vadd.f32 %v126, %v145
    %147 = vdwg.mxu0
    %v148 = vadd.f32 %v146, %v66
    %v149 = vmax.f32 %v148, 0.0
    %150 = vst [vmem:[#allocation8] sm:$0x3] %v149
    // Predicated region
    $region34: #{tpu_custom_call.1} parent=1 // pred_check
      _
    $region35: #{tpu_custom_call.1} parent=1 // pred_check_branch
      %152 = sbr.rel (0) target = $region37
    $region36: #{tpu_custom_call.1} parent=1 // pred_region
      %154 = vsyncadd [#allocation4], 0
      %s156 = sshll.u32 [#allocation8], 4
      %s157 = int_to_ptr.vmem [resolvable:$true] %s156
      %s158 = sshll.u32 %s5, 4
      %s159 = int_to_ptr.hbm [resolvable:$true] %s158
      %161 = dma.vmem_to_hbm [thread:$0]  %s157, 32, %s159, [#allocation4]
    $region37: #{tpu_custom_call.1} parent=1 // pred_fallthru
      _
    // Predicated region
    $region38: #{tpu_custom_call.1} parent=1 // pred_check
      _
    $region39: #{tpu_custom_call.1} parent=1 // pred_check_branch
      %163 = sbr.rel (0) target = $region41
    $region40: #{tpu_custom_call.1} parent=1 // pred_region
      %165 = dma.done [#allocation4], 32
    $region41: #{tpu_custom_call.1} parent=1 // pred_fallthru
      _
    %166 = vsyncpa [#allocation3], 1
    %167 = vsyncpa [#allocation6], 1
    %168 = vsyncpa [#allocation4], 1

// kernel: tpu_custom_call.1
$region0: #{tpu_custom_call.1}
  #allocation0 [shape = 'u32[]', space=smem, size = 0x4, offset = 0x4, fixed_abs, tag = 'smem constant byte address 0x4 - core index']
  #allocation1 [shape = 'u32[72,128]{1,0:T(1,128)}', space=vmem, size = 0x9000, scoped, tag = 'internal scratch']
  %s0 = inlined_call_operand.hbm [shape: f32[2,128], index: 0, kind: input, shape index: {}]
  %s1 = inlined_call_operand.hbm [shape: f32[128,128], index: 1, kind: input, shape index: {}]
  %s2 = inlined_call_operand.vmem [shape: f32[1,128], index: 2, kind: input, shape index: {}]
  %s3 = inlined_call_operand.hbm [shape: f32[128,128], index: 3, kind: input, shape index: {}]
  %s4 = inlined_call_operand.vmem [shape: f32[1,128], index: 4, kind: input, shape index: {}]
  %s5 = inlined_call_operand.hbm [shape: f32[2,128], index: 5, kind: output, shape index: {}]
  %s6 = sld [smem:[#allocation0]]
  $region42: #{tpu_custom_call.1} parent=0
    _
  %s8 = ssub.s32 1, %s6
  %s9 = scalar_select 0, %s8, %s6
  $region1: #{tpu_custom_call.1} parent=0
    #allocation2 [shape = 'u8[1024]{0}', space=vmem, size = 0x400, scoped, tag = 'input window, operand 0, single buffered']
    #allocation3 [shape = 's32[1]{0}', space=sflag, size = 0x4, scoped, tag = 'scoped memory for tpu_custom_call.1']
    #allocation4 [shape = 's32[1]{0}', space=sflag, size = 0x4, scoped, tag = 'scoped memory for tpu_custom_call.1']
    #allocation5 [shape = 'u8[65536]{0}', space=vmem, size = 0x10000, scoped, tag = 'input window, operand 1, single buffered']
    #allocation6 [shape = 's32[1]{0}', space=sflag, size = 0x4, scoped, tag = 'scoped memory for tpu_custom_call.1']
    #allocation7 [shape = 'u8[65536]{0}', space=vmem, size = 0x10000, scoped, tag = 'input window, operand 3, single buffered']
    #allocation8 [shape = 'u8[1024]{0}', space=vmem, size = 0x400, scoped, tag = 'output window, operand 0, single buffered']
    %10 = vsyncpa [#allocation3], 0
    %11 = vsyncpa [#allocation6], 0
    %12 = vsyncpa [#allocation4], 0
    // Predicated region
    $region2: #{tpu_custom_call.1} parent=1 // pred_check
      _
    $region3: #{tpu_custom_call.1} parent=1 // pred_check_branch
      %14 = sbr.rel (0) target = $region5
    $region4: #{tpu_custom_call.1} parent=1 // pred_region
      %16 = vsyncadd [#allocation3], 0
      %s18 = sshll.u32 %s0, 4
      %s19 = int_to_ptr.hbm [resolvable:$true] %s18
      %s20 = sshll.u32 [#allocation2], 4
      %s21 = int_to_ptr.vmem [resolvable:$true] %s20
      %23 = dma.hbm_to_vmem [thread:$0]  %s19, 32, %s21, [#allocation3]
    $region5: #{tpu_custom_call.1} parent=1 // pred_fallthru
      _
    // Predicated region
    $region6: #{tpu_custom_call.1} parent=1 // pred_check
      _
    $region7: #{tpu_custom_call.1} parent=1 // pred_check_branch
      %25 = sbr.rel (0) target = $region9
    $region8: #{tpu_custom_call.1} parent=1 // pred_region
      %27 = vsyncadd [#allocation6], 0
      %s28 = sshll.u32 %s1, 4
      %s29 = int_to_ptr.hbm [resolvable:$true] %s28
      %s30 = sshll.u32 [#allocation5], 4
      %s31 = int_to_ptr.vmem [resolvable:$true] %s30
      %36 = dma.hbm_to_vmem [thread:$0]  %s29, 2048, %s31, [#allocation6], 128, 128, 8
    $region9: #{tpu_custom_call.1} parent=1 // pred_fallthru
      _
    // Predicated region
    $region10: #{tpu_custom_call.1} parent=1 // pred_check
      _
    $region11: #{tpu_custom_call.1} parent=1 // pred_check_branch
      %38 = sbr.rel (0) target = $region13
    $region12: #{tpu_custom_call.1} parent=1 // pred_region
      _
    $region13: #{tpu_custom_call.1} parent=1 // pred_fallthru
      _
    // Predicated region
    $region14: #{tpu_custom_call.1} parent=1 // pred_check
      _
    $region15: #{tpu_custom_call.1} parent=1 // pred_check_branch
      %40 = sbr.rel (0) target = $region17
    $region16: #{tpu_custom_call.1} parent=1 // pred_region
      %42 = vsyncadd [#allocation6], 0
      %s43 = sshll.u32 %s3, 4
      %s44 = int_to_ptr.hbm [resolvable:$true] %s43
      %s45 = sshll.u32 [#allocation7], 4
      %s46 = int_to_ptr.vmem [resolvable:$true] %s45
      %51 = dma.hbm_to_vmem [thread:$0]  %s44, 2048, %s46, [#allocation6], 128, 128, 8
    $region17: #{tpu_custom_call.1} parent=1 // pred_fallthru
      _
    // Predicated region
    $region18: #{tpu_custom_call.1} parent=1 // pred_check
      _
    $region19: #{tpu_custom_call.1} parent=1 // pred_check_branch
      %53 = sbr.rel (0) target = $region21
    $region20: #{tpu_custom_call.1} parent=1 // pred_region
      _
    $region21: #{tpu_custom_call.1} parent=1 // pred_fallthru
      _
    // Predicated region
    $region22: #{tpu_custom_call.1} parent=1 // pred_check
      _
    $region23: #{tpu_custom_call.1} parent=1 // pred_check_branch
      %55 = sbr.rel (0) target = $region25
    $region24: #{tpu_custom_call.1} parent=1 // pred_region
      %57 = dma.done [#allocation3], 32
    $region25: #{tpu_custom_call.1} parent=1 // pred_fallthru
      _
    // Predicated region
    $region26: #{tpu_custom_call.1} parent=1 // pred_check
      _
    $region27: #{tpu_custom_call.1} parent=1 // pred_check_branch
      %59 = sbr.rel (0) target = $region29
    $region28: #{tpu_custom_call.1} parent=1 // pred_region
      %61 = dma.done [#allocation6], 2048
    $region29: #{tpu_custom_call.1} parent=1 // pred_fallthru
      _
    // Predicated region
    $region30: #{tpu_custom_call.1} parent=1 // pred_check
      _
    $region31: #{tpu_custom_call.1} parent=1 // pred_check_branch
      %63 = sbr.rel (0) target = $region33
    $region32: #{tpu_custom_call.1} parent=1 // pred_region
      %65 = dma.done [#allocation6], 2048
    $region33: #{tpu_custom_call.1} parent=1 // pred_fallthru
      _
    %v66 = vld [vmem:[#allocation2] sm:$0x3]
    %v67 = vld [vmem:[#allocation5] sm:$0xff]
    %v68 = vld [vmem:[#allocation5 + $0x8] sm:$0xff]
    %v69 = vld [vmem:[#allocation5 + $0x10] sm:$0xff]
    %v70 = vld [vmem:[#allocation5 + $0x18] sm:$0xff]
    %v71 = vld [vmem:[#allocation5 + $0x20] sm:$0xff]
    %v72 = vld [vmem:[#allocation5 + $0x28] sm:$0xff]
    %v73 = vld [vmem:[#allocation5 + $0x30] sm:$0xff]
    %v74 = vld [vmem:[#allocation5 + $0x38] sm:$0xff]
    %v75 = vld [vmem:[#allocation5 + $0x40] sm:$0xff]
    %v76 = vld [vmem:[#allocation5 + $0x48] sm:$0xff]
    %v77 = vld [vmem:[#allocation5 + $0x50] sm:$0xff]
    %v78 = vld [vmem:[#allocation5 + $0x58] sm:$0xff]
    %v79 = vld [vmem:[#allocation5 + $0x60] sm:$0xff]
    %v80 = vld [vmem:[#allocation5 + $0x68] sm:$0xff]
    %v81 = vld [vmem:[#allocation5 + $0x70] sm:$0xff]
    %v82 = vld [vmem:[#allocation5 + $0x78] sm:$0xff]
    %v83 = vld [vmem:[%s2] sm:$0x1]
    %v85 = vperm.slane %v83, 0
    %87 = vmatpush.msra.mxu0 %v82
    %88 = vmatpush.msra.mxu0 %v81
    %89 = vmatpush.msra.mxu0 %v80
    %90 = vmatpush.msra.mxu0 %v79
    %91 = vmatpush.msra.mxu0 %v78
    %92 = vmatpush.msra.mxu0 %v77
    %93 = vmatpush.msra.mxu0 %v76
    %94 = vmatpush.msra.mxu0 %v75
    %95 = vmatpush.msra.mxu0 %v74
    %96 = vmatpush.msra.mxu0 %v73
    %97 = vmatpush.msra.mxu0 %v72
    %98 = vmatpush.msra.mxu0 %v71
    %99 = vmatpush.msra.mxu0 %v70
    %100 = vmatpush.msra.mxu0 %v69
    %101 = vmatpush.msra.mxu0 %v68
    %102 = vmatpush.msra.mxu0 %v67
    %103 = vmatmul.f32.gmra.mxu0 %v66
    %v104 = vpop.f32.mrf.mxu0
    %v105 = vadd.f32 %v85, %v104
    %106 = vdwg.mxu0
    %v107 = vmax.f32 %v105, 0.0
    %v108 = vld [vmem:[#allocation7] sm:$0xff]
    %v109 = vld [vmem:[#allocation7 + $0x8] sm:$0xff]
    %v110 = vld [vmem:[#allocation7 + $0x10] sm:$0xff]
    %v111 = vld [vmem:[#allocation7 + $0x18] sm:$0xff]
    %v112 = vld [vmem:[#allocation7 + $0x20] sm:$0xff]
    %v113 = vld [vmem:[#allocation7 + $0x28] sm:$0xff]
    %v114 = vld [vmem:[#allocation7 + $0x30] sm:$0xff]
    %v115 = vld [vmem:[#allocation7 + $0x38] sm:$0xff]
    %v116 = vld [vmem:[#allocation7 + $0x40] sm:$0xff]
    %v117 = vld [vmem:[#allocation7 + $0x48] sm:$0xff]
    %v118 = vld [vmem:[#allocation7 + $0x50] sm:$0xff]
    %v119 = vld [vmem:[#allocation7 + $0x58] sm:$0xff]
    %v120 = vld [vmem:[#allocation7 + $0x60] sm:$0xff]
    %v121 = vld [vmem:[#allocation7 + $0x68] sm:$0xff]
    %v122 = vld [vmem:[#allocation7 + $0x70] sm:$0xff]
    %v123 = vld [vmem:[#allocation7 + $0x78] sm:$0xff]
    %v124 = vld [vmem:[%s4] sm:$0x1]
    %v126 = vperm.slane %v124, 0
    %128 = vmatpush.msra.mxu0 %v123
    %129 = vmatpush.msra.mxu0 %v122
    %130 = vmatpush.msra.mxu0 %v121
    %131 = vmatpush.msra.mxu0 %v120
    %132 = vmatpush.msra.mxu0 %v119
    %133 = vmatpush.msra.mxu0 %v118
    %134 = vmatpush.msra.mxu0 %v117
    %135 = vmatpush.msra.mxu0 %v116
    %136 = vmatpush.msra.mxu0 %v115
    %137 = vmatpush.msra.mxu0 %v114
    %138 = vmatpush.msra.mxu0 %v113
    %139 = vmatpush.msra.mxu0 %v112
    %140 = vmatpush.msra.mxu0 %v111
    %141 = vmatpush.msra.mxu0 %v110
    %142 = vmatpush.msra.mxu0 %v109
    %143 = vmatpush.msra.mxu0 %v108
    %144 = vmatmul.f32.gmra.mxu0 %v107
    %v145 = vpop.f32.mrf.mxu0
    %v146 = vadd.f32 %v126, %v145
    %147 = vdwg.mxu0
    %v148 = vadd.f32 %v146, %v66
    %v149 = vmax.f32 %v148, 0.0
    %150 = vst [vmem:[#allocation8] sm:$0x3] %v149
    // Predicated region
    $region34: #{tpu_custom_call.1} parent=1 // pred_check
      _
    $region35: #{tpu_custom_call.1} parent=1 // pred_check_branch
      %152 = sbr.rel (0) target = $region37
    $region36: #{tpu_custom_call.1} parent=1 // pred_region
      %154 = vsyncadd [#allocation4], 0
      %s156 = sshll.u32 [#allocation8], 4
      %s157 = int_to_ptr.vmem [resolvable:$true] %s156
      %s158 = sshll.u32 %s5, 4
      %s159 = int_to_ptr.hbm [resolvable:$true] %s158
      %161 = dma.vmem_to_hbm [thread:$0]  %s157, 32, %s159, [#allocation4]
    $region37: #{tpu_custom_call.1} parent=1 // pred_fallthru
      _
    // Predicated region
    $region38: #{tpu_custom_call.1} parent=1 // pred_check
      _
    $region39: #{tpu_custom_call.1} parent=1 // pred_check_branch
      %163 = sbr.rel (0) target = $region41
    $region40: #{tpu_custom_call.1} parent=1 // pred_region
      %165 = dma.done [#allocation4], 32
    $region41: #{tpu_custom_call.1} parent=1 // pred_fallthru
      _
    %166 = vsyncpa [#allocation3], 1
    %167 = vsyncpa [#allocation6], 1
    %168 = vsyncpa [#allocation4], 1

</llo_original>
